<compile_context>
chip_gen: v7x
topology: tpu7x:2x2x1
jax: 0.10.0
libtpu: 0.0.40
codegen_flags: <defaults>
</compile_context>

<pallas_src>
import functools

import jax
import jax.numpy as jnp
from jax import lax
from jax.experimental import pallas as pl
from jax.experimental.pallas import tpu as pltpu


def _round_up(x, m):
    return ((x + m - 1) // m) * m


def _clip_loss_kernel(v_ref, t_ref, *refs, temperature, b_actual, tm, tn,
                      with_sim):
    """One (row-block, column-block) tile of the similarity matrix.

    v_ref    : (tm, D_pad)  bf16, pre-normalized vision rows (block i)
    t_ref    : (tn, D_pad)  bf16, pre-normalized text rows   (block j)
    sim_ref  : (tm, tn)     bf16 similarity tile (only when with_sim)
    colsum_ref : (8, tn)    row 0 = per-column sum_i exp(sim - 1/T) over the
                            valid rows of this row block (rows 1..7 = 0)
    part_ref : (8, 128)     [0,0] = sum_i (row_lse_i - diag_i)  (v2t partial)
                            [0,1] = sum_i diag_i                (shared)
    rowsum_sc, diag_sc : (tm, 1) f32 scratch, accumulated across column blocks
    """
    if with_sim:
        sim_ref, colsum_ref, part_ref, rowsum_sc, diag_sc = refs
    else:
        sim_ref = None
        colsum_ref, part_ref, rowsum_sc, diag_sc = refs

    i = pl.program_id(0)
    j = pl.program_id(1)
    nj = pl.num_programs(1)
    inv_temp = 1.0 / temperature
    row0 = i * tm
    col0 = j * tn

    @pl.when(j == 0)
    def _():
        rowsum_sc[...] = jnp.zeros_like(rowsum_sc)
        diag_sc[...] = jnp.zeros_like(diag_sc)

    # MXU matmul: bf16 operands, f32 accumulate (NT contraction over embed).
    sim = lax.dot_general(v_ref[...], t_ref[...], (((1,), (1,)), ((), ())),
                          preferred_element_type=jnp.float32) * inv_temp
    if with_sim:
        sim_ref[...] = sim.astype(sim_ref.dtype)

    # Validity masks for rows/cols that are only batch padding.
    row_idx = row0 + lax.broadcasted_iota(jnp.int32, (tm, tn), 0)
    col_idx = col0 + lax.broadcasted_iota(jnp.int32, (tm, tn), 1)
    row_valid = row_idx < b_actual
    col_valid = col_idx < b_actual

    # Single global softmax shift: features are unit-normalized, so
    # |sim| <= 1/temperature and exp(sim - 1/T) <= ~1 (no overflow).
    # NOTE: for very small temperatures (T <~ 0.023) exp(-2/T) underflows f32;
    # fall back to a true per-row/column max shift there.  Safe at T = 0.07.
    e = jnp.where(col_valid, jnp.exp(sim - inv_temp), 0.0)

    # Accumulate per-row exp-sums and the diagonal across column blocks.
    rowsum_sc[...] += jnp.sum(e, axis=1, keepdims=True)
    diag_sc[...] += jnp.sum(jnp.where(row_idx == col_idx, sim, 0.0),
                            axis=1, keepdims=True)

    # Per-column exp-sum partial over the valid rows of this row block.
    col_part = jnp.sum(jnp.where(row_valid, e, 0.0), axis=0, keepdims=True)
    sub_c = lax.broadcasted_iota(jnp.int32, (8, tn), 0)
    colsum_ref[...] = jnp.where(sub_c == 0, col_part, 0.0)

    # Finalize the row-direction (v2t) partials after the last column block.
    @pl.when(j == nj - 1)
    def _():
        rv = (row0 + lax.broadcasted_iota(jnp.int32, (tm, 1), 0)) < b_actual
        row_lse = jnp.log(rowsum_sc[...]) + inv_temp            # (tm, 1)
        v2t_part = jnp.sum(jnp.where(rv, row_lse - diag_sc[...], 0.0),
                           keepdims=True)                        # (1, 1)
        diag_part = jnp.sum(jnp.where(rv, diag_sc[...], 0.0), keepdims=True)
        sub = lax.broadcasted_iota(jnp.int32, (8, 128), 0)
        lane = lax.broadcasted_iota(jnp.int32, (8, 128), 1)
        part_ref[...] = (jnp.where((sub == 0) & (lane == 0), v2t_part, 0.0) +
                         jnp.where((sub == 0) & (lane == 1), diag_part, 0.0))


def _choose_tile(b_min_pad, d_pad, block_rows=None):
    """Pick the biggest square (tile, tile) block that fits this chip's VMEM."""
    try:
        vmem_cap = int(pltpu.get_tpu_info().vmem_capacity_bytes)
    except Exception:
        vmem_cap = 64 * 1024 * 1024          # v7x-safe fallback
    if vmem_cap <= 0:
        vmem_cap = 64 * 1024 * 1024
    budget = int(vmem_cap * 0.6)

    def _need(t):
        return (2 * t * d_pad * 2            # v block, bf16, double-buffered
                + 2 * t * d_pad * 2          # t block, bf16, double-buffered
                + 2 * t * t * 2              # bf16 sim block, double-buffered
                + 2 * 8 * t * 4              # colsum partial block
                + 2 * 8 * 128 * 4            # scalar-parts block
                + 2 * t * 128 * 4            # rowsum/diag scratch (lane-padded)
                + 4 * t * t * 4)             # in-kernel f32 temporaries

    if block_rows is not None:
        tile = int(block_rows)
    else:
        tile = 128
        for cand in (2048, 1024, 512, 256):
            if cand > b_min_pad:
                continue
            if _need(cand) <= budget:
                tile = cand
                break
    vmem_limit = int(min(vmem_cap, max(2 * _need(tile), 32 * 1024 * 1024)))
    return tile, vmem_limit


def _clip_loss_pallas(vision_features, text_features, temperature,
                      block_rows=None, with_sim=True):
    B, D = vision_features.shape
    d_pad = _round_up(max(D, 1), 128)
    b_min = _round_up(max(B, 8), 128)
    tile, vmem_limit = _choose_tile(b_min, d_pad, block_rows)
    b_pad = _round_up(b_min, tile)           # pad B up to a tile multiple
    nb = b_pad // tile

    # Pre-normalize ONCE in the wrapper (f32 rsqrt == x / max(||x||, 1e-12)),
    # then cast to bf16 MXU operands.  Zero padding rows/cols stay zero and
    # every reduction in the kernel masks them out.
    def _norm(x):
        x = x.astype(jnp.float32)
        return x * lax.rsqrt(
            jnp.maximum(jnp.sum(x * x, axis=1, keepdims=True), 1e-24))

    v = jnp.pad(_norm(vision_features).astype(jnp.bfloat16),
                ((0, b_pad - B), (0, d_pad - D)))
    t = jnp.pad(_norm(text_features).astype(jnp.bfloat16),
                ((0, b_pad - B), (0, d_pad - D)))

    kernel = functools.partial(_clip_loss_kernel,
                               temperature=float(temperature),
                               b_actual=B, tm=tile, tn=tile, with_sim=with_sim)

    out_shape = []
    out_specs = []
    if with_sim:
        out_shape.append(jax.ShapeDtypeStruct((b_pad, b_pad), jnp.bfloat16))
        out_specs.append(pl.BlockSpec((tile, tile), lambda i, j: (i, j)))
    out_shape.append(jax.ShapeDtypeStruct((nb * 8, b_pad), jnp.float32))
    out_specs.append(pl.BlockSpec((8, tile), lambda i, j: (i, j)))
    out_shape.append(jax.ShapeDtypeStruct((nb * 8, 128), jnp.float32))
    out_specs.append(pl.BlockSpec((8, 128), lambda i, j: (i, 0)))

    outs = pl.pallas_call(
        kernel,
        out_shape=tuple(out_shape),
        grid_spec=pltpu.PrefetchScalarGridSpec(
            num_scalar_prefetch=0,
            grid=(nb, nb),
            in_specs=[
                pl.BlockSpec((tile, d_pad), lambda i, j: (i, 0)),
                pl.BlockSpec((tile, d_pad), lambda i, j: (j, 0)),
            ],
            out_specs=tuple(out_specs),
            scratch_shapes=[pltpu.VMEM((tile, 1), jnp.float32),
                            pltpu.VMEM((tile, 1), jnp.float32)]),
        compiler_params=pltpu.CompilerParams(
            dimension_semantics=("parallel", "arbitrary"),
            vmem_limit_bytes=vmem_limit,
        ),
    )(v, t)

    if with_sim:
        sim_pad, colsum, parts = outs
    else:
        sim_pad = None
        colsum, parts = outs
    return sim_pad, colsum, parts


def clip_style_loss(vision_features, text_features, temperature=0.07,
                    reduction="mean", block_rows=None, return_diagnostics=True):
    """CLIP-style contrastive loss (match_ids=None, label_smoothing=0)."""
    B = vision_features.shape[0]
    if B == 0:
        return {"loss": jnp.array(0.0, jnp.float32)}
    if B != text_features.shape[0]:
        raise ValueError(
            f"Batch size mismatch: vision={vision_features.shape}, "
            f"text={text_features.shape}")
    if reduction not in ("mean", "sum"):
        # TODO(synk): reduction="none" returns per-row losses; not implemented.
        raise NotImplementedError(f"reduction={reduction!r} not supported")

    sim_pad, colsum, parts = _clip_loss_pallas(
        vision_features, text_features, temperature,
        block_rows=block_rows, with_sim=return_diagnostics)

    # --- finish the tiny cross-block reductions (plain JAX, O(nb * B)) ---
    inv_temp = 1.0 / float(temperature)
    part_tot = jnp.sum(parts, axis=0)                 # (128,)
    v2t_sum = part_tot[0]                             # sum_i (row_lse - diag)
    diag_sum = part_tot[1]                            # sum_i diag_i
    col_expsum = jnp.sum(colsum, axis=0)[:B]          # (B,)
    t2v_sum = jnp.sum(jnp.log(col_expsum) + inv_temp) - diag_sum

    denom = float(B) if reduction == "mean" else 1.0
    v2t_loss = v2t_sum / denom
    t2v_loss = t2v_sum / denom
    loss = 0.5 * (v2t_loss + t2v_loss)

    result = {"loss": loss, "v2t_loss": v2t_loss, "t2v_loss": t2v_loss}
    if not return_diagnostics:
        return result

    # --- no-grad diagnostics from the (bf16) sim matrix: ONE top_k per
    #     direction, argmax/recall derived from it, no host syncs ---
    sim = sim_pad[:B, :B]
    sim32 = sim.astype(jnp.float32)
    targets = jnp.arange(B, dtype=jnp.int32)
    kmax = min(10, B)
    _, top_v2t = lax.top_k(sim32, kmax)
    _, top_t2v = lax.top_k(sim32.T, kmax)
    hit_v2t = top_v2t == targets[:, None]
    hit_t2v = top_t2v == targets[:, None]
    v2t_acc = jnp.mean(hit_v2t[:, 0].astype(jnp.float32))
    t2v_acc = jnp.mean(hit_t2v[:, 0].astype(jnp.float32))
    accuracy = (v2t_acc + t2v_acc) / 2.0
    mean_sim = jnp.mean(sim32)
    matched_sim = jnp.mean(jnp.diagonal(sim32))
    sim_gap = matched_sim - mean_sim
    recalls = {}
    for k in (1, 5, 10):
        ka = min(k, B)
        r_v2t = jnp.mean(jnp.any(hit_v2t[:, :ka], axis=1).astype(jnp.float32))
        r_t2v = jnp.mean(jnp.any(hit_t2v[:, :ka], axis=1).astype(jnp.float32))
        recalls[f"v2t_recall@{k}"] = r_v2t
        recalls[f"t2v_recall@{k}"] = r_t2v
        recalls[f"avg_recall@{k}"] = (r_v2t + r_t2v) / 2.0

    # TODO(synk): match_ids string-grouping + torch.randint target sampling,
    # label_smoothing, and hard-negative branches are not implemented.
    # TODO(synk): forward-only; wrap in jax.custom_vjp (or recompute in pure
    # JAX for grad) before using on a training hot path.
    result.update({
        "v2t_accuracy": v2t_acc,
        "t2v_accuracy": t2v_acc,
        "accuracy": accuracy,
        "mean_similarity": mean_sim,
        "matched_similarity": matched_sim,
        "similarity_gap": sim_gap,
        "recalls": recalls,
        "similarity_matrix": sim,
    })
    return result


def _reference(vision, text, temperature):
    """Pure-JAX reference mirroring the kernel's bf16-operand matmul."""
    inv_temp = 1.0 / float(temperature)
    vn = vision * lax.rsqrt(
        jnp.maximum(jnp.sum(vision * vision, axis=1, keepdims=True), 1e-24))
    tn = text * lax.rsqrt(
        jnp.maximum(jnp.sum(text * text, axis=1, keepdims=True), 1e-24))
    sim = jnp.dot(vn.astype(jnp.bfloat16), tn.astype(jnp.bfloat16).T,
                  preferred_element_type=jnp.float32) * inv_temp
    lp_r = jax.nn.log_softmax(sim, axis=1)
    lp_c = jax.nn.log_softmax(sim.T, axis=1)
    loss = 0.5 * (-jnp.mean(jnp.diagonal(lp_r)) - jnp.mean(jnp.diagonal(lp_c)))
    return sim, loss


if __name__ == "__main__":
    key = jax.random.PRNGKey(0)
    k_v, k_t, k_v2, k_t2 = jax.random.split(key, 4)

    # Case 1: small shapes consistent with the module: [batch, embed_dim].
    B, D = 8, 32
    vision = jax.random.normal(k_v, (B, D), dtype=jnp.float32)
    text = jax.random.normal(k_t, (B, D), dtype=jnp.float32)
    out = clip_style_loss(vision, text, temperature=0.07)
    jax.block_until_ready(out["loss"])
    jax.block_until_ready(out["similarity_matrix"])
    sim_ref, loss_ref = _reference(vision, text, 0.07)
    assert jnp.allclose(out["similarity_matrix"].astype(jnp.float32), sim_ref,
                        atol=8e-2, rtol=1e-2), "sim mismatch (case 1)"
    assert jnp.allclose(out["loss"], loss_ref, atol=1e-3, rtol=1e-3), (
        out["loss"], loss_ref)

    # Case 2: non-aligned B/D, forces a multi-block grid in BOTH axes
    # (row-block parallel axis + column-block reduction axis) + padding masks.
    B2, D2 = 136, 72
    vision2 = jax.random.normal(k_v2, (B2, D2), dtype=jnp.float32)
    text2 = jax.random.normal(k_t2, (B2, D2), dtype=jnp.float32)
    out2 = clip_style_loss(vision2, text2, temperature=0.07, block_rows=128)
    jax.block_until_ready(out2["loss"])
    sim_ref2, loss_ref2 = _reference(vision2, text2, 0.07)
    assert jnp.allclose(out2["similarity_matrix"].astype(jnp.float32), sim_ref2,
                        atol=8e-2, rtol=1e-2), "sim mismatch (case 2)"
    assert jnp.allclose(out2["loss"], loss_ref2, atol=1e-3, rtol=1e-3), (
        out2["loss"], loss_ref2)

    # Case 3: loss-only training path (no similarity writeback / diagnostics).
    out3 = clip_style_loss(vision2, text2, temperature=0.07, block_rows=128,
                           return_diagnostics=False)
    jax.block_until_ready(out3["loss"])
    assert jnp.allclose(out3["loss"], loss_ref2, atol=1e-3, rtol=1e-3), (
        out3["loss"], loss_ref2)

    print("KERNEL_OK")
</pallas_src>

<mosaic_0001>
module attributes {stable_mosaic.version = 11 : i64} {
  func.func @_clip_loss_kernel(%arg0: i32, %arg1: i32, %arg2: memref<128x128xbf16, #tpu.memory_space<vmem>>, %arg3: memref<128x128xbf16, #tpu.memory_space<vmem>>, %arg4: memref<128x128xbf16, #tpu.memory_space<vmem>>, %arg5: memref<8x128xf32, #tpu.memory_space<vmem>>, %arg6: memref<8x128xf32, #tpu.memory_space<vmem>>, %arg7: memref<128x1xf32, #tpu.memory_space<vmem>>, %arg8: memref<128x1xf32, #tpu.memory_space<vmem>>) attributes {dimension_semantics = [#tpu.dimension_semantics<parallel>, #tpu.dimension_semantics<arbitrary>], iteration_bounds = array<i64: 1, 1>, scalar_prefetch = 0 : i64, scratch_operands = 2 : i64, tpu.core_type = #tpu.core_type<tc>, window_params = [{transform_indices = @transform_0, window_bounds = array<i64: 128, 128>}, {transform_indices = @transform_1, window_bounds = array<i64: 128, 128>}, {transform_indices = @transform_2, window_bounds = array<i64: 128, 128>}, {transform_indices = @transform_3, window_bounds = array<i64: 8, 128>}, {transform_indices = @transform_4, window_bounds = array<i64: 8, 128>}]} {
    %c128_i32 = arith.constant 128 : i32
    %0 = arith.muli %arg0, %c128_i32 : i32
    %c128_i32_0 = arith.constant 128 : i32
    %1 = arith.muli %arg1, %c128_i32_0 : i32
    %c0_i32 = arith.constant 0 : i32
    %2 = arith.cmpi eq, %arg1, %c0_i32 : i32
    %3 = arith.extui %2 : i1 to i32
    %c0_i32_1 = arith.constant 0 : i32
    %4 = arith.cmpi ne, %3, %c0_i32_1 : i32
    scf.if %4 {
      %cst_30 = arith.constant 0.000000e+00 : f32
      %55 = vector.broadcast %cst_30 : f32 to vector<128x1xf32>
      %c0_31 = arith.constant 0 : index
      %c0_32 = arith.constant 0 : index
      %56 = vector.load %arg7[%c0_31, %c0_32] : memref<128x1xf32, #tpu.memory_space<vmem>>, vector<128x1xf32>
      tpu.vector_store %arg7[%c0_31, %c0_32], %55 {strides = array<i32>} : memref<128x1xf32, #tpu.memory_space<vmem>>, vector<128x1xf32>,
      %cst_33 = arith.constant 0.000000e+00 : f32
      %57 = vector.broadcast %cst_33 : f32 to vector<128x1xf32>
      %c0_34 = arith.constant 0 : index
      %c0_35 = arith.constant 0 : index
      %58 = vector.load %arg8[%c0_34, %c0_35] : memref<128x1xf32, #tpu.memory_space<vmem>>, vector<128x1xf32>
      tpu.vector_store %arg8[%c0_34, %c0_35], %57 {strides = array<i32>} : memref<128x1xf32, #tpu.memory_space<vmem>>, vector<128x1xf32>,
    } else {
    }
    %c0 = arith.constant 0 : index
    %c0_2 = arith.constant 0 : index
    %5 = vector.load %arg2[%c0, %c0_2] : memref<128x128xbf16, #tpu.memory_space<vmem>>, vector<128x128xbf16>
    %c0_3 = arith.constant 0 : index
    %c0_4 = arith.constant 0 : index
    %6 = vector.load %arg3[%c0_3, %c0_4] : memref<128x128xbf16, #tpu.memory_space<vmem>>, vector<128x128xbf16>
    %cst = arith.constant dense<0.000000e+00> : vector<128x128xf32>
    %7 = tpu.matmul %5, %6, %cst {dimension_numbers = #tpu.dot_dimension_numbers<[1], [1], [0], [0], [0, 0, 1, 0], [], []>} : vector<128x128xbf16>, vector<128x128xbf16>, vector<128x128xf32> -> vector<128x128xf32>
    %cst_5 = arith.constant 14.2857141 : f32
    %8 = vector.broadcast %cst_5 : f32 to vector<128x128xf32>
    %9 = arith.mulf %7, %8 : vector<128x128xf32>
    %10 = arith.truncf %9 : vector<128x128xf32> to vector<128x128xbf16>
    %c0_6 = arith.constant 0 : index
    %c0_7 = arith.constant 0 : index
    %11 = vector.load %arg4[%c0_6, %c0_7] : memref<128x128xbf16, #tpu.memory_space<vmem>>, vector<128x128xbf16>
    tpu.vector_store %arg4[%c0_6, %c0_7], %10 {strides = array<i32>} : memref<128x128xbf16, #tpu.memory_space<vmem>>, vector<128x128xbf16>,
    %12 = tpu.iota {dimensions = array<i32: 0>} : vector<128x128xi32>
    %13 = vector.broadcast %0 : i32 to vector<128x128xi32>
    %14 = arith.addi %13, %12 : vector<128x128xi32>
    %15 = tpu.iota {dimensions = array<i32: 1>} : vector<128x128xi32>
    %16 = vector.broadcast %1 : i32 to vector<128x128xi32>
    %17 = arith.addi %16, %15 : vector<128x128xi32>
    %c8_i32 = arith.constant 8 : i32
    %18 = vector.broadcast %c8_i32 : i32 to vector<128x128xi32>
    %19 = arith.cmpi slt, %14, %18 : vector<128x128xi32>
    %c8_i32_8 = arith.constant 8 : i32
    %20 = vector.broadcast %c8_i32_8 : i32 to vector<128x128xi32>
    %21 = arith.cmpi slt, %17, %20 : vector<128x128xi32>
    %cst_9 = arith.constant 14.2857141 : f32
    %22 = vector.broadcast %cst_9 : f32 to vector<128x128xf32>
    %23 = arith.subf %9, %22 : vector<128x128xf32>
    %24 = math.exp %23 : vector<128x128xf32>
    %cst_10 = arith.constant 0.000000e+00 : f32
    %25 = vector.broadcast %cst_10 : f32 to vector<128x128xf32>
    %26 = arith.select %21, %24, %25 : vector<128x128xi1>, vector<128x128xf32>
    %c0_11 = arith.constant 0 : index
    %c0_12 = arith.constant 0 : index
    %27 = vector.load %arg7[%c0_11, %c0_12] : memref<128x1xf32, #tpu.memory_space<vmem>>, vector<128x1xf32>
    %cst_13 = arith.constant dense<0.000000e+00> : vector<128xf32>
    %28 = vector.multi_reduction <add>, %26, %cst_13 [1] : vector<128x128xf32> to vector<128xf32>
    %29 = vector.shape_cast %28 : vector<128xf32> to vector<128x1xf32>
    %30 = arith.addf %27, %29 : vector<128x1xf32>
    %c0_14 = arith.constant 0 : index
    %c0_15 = arith.constant 0 : index
    %31 = vector.load %arg7[%c0_14, %c0_15] : memref<128x1xf32, #tpu.memory_space<vmem>>, vector<128x1xf32>
    tpu.vector_store %arg7[%c0_14, %c0_15], %30 {strides = array<i32>} : memref<128x1xf32, #tpu.memory_space<vmem>>, vector<128x1xf32>,
    %c0_16 = arith.constant 0 : index
    %c0_17 = arith.constant 0 : index
    %32 = vector.load %arg8[%c0_16, %c0_17] : memref<128x1xf32, #tpu.memory_space<vmem>>, vector<128x1xf32>
    %33 = arith.cmpi eq, %14, %17 : vector<128x128xi32>
    %cst_18 = arith.constant 0.000000e+00 : f32
    %34 = vector.broadcast %cst_18 : f32 to vector<128x128xf32>
    %35 = arith.select %33, %9, %34 : vector<128x128xi1>, vector<128x128xf32>
    %cst_19 = arith.constant dense<0.000000e+00> : vector<128xf32>
    %36 = vector.multi_reduction <add>, %35, %cst_19 [1] : vector<128x128xf32> to vector<128xf32>
    %37 = vector.shape_cast %36 : vector<128xf32> to vector<128x1xf32>
    %38 = arith.addf %32, %37 : vector<128x1xf32>
    %c0_20 = arith.constant 0 : index
    %c0_21 = arith.constant 0 : index
    %39 = vector.load %arg8[%c0_20, %c0_21] : memref<128x1xf32, #tpu.memory_space<vmem>>, vector<128x1xf32>
    tpu.vector_store %arg8[%c0_20, %c0_21], %38 {strides = array<i32>} : memref<128x1xf32, #tpu.memory_space<vmem>>, vector<128x1xf32>,
    %cst_22 = arith.constant 0.000000e+00 : f32
    %40 = vector.broadcast %cst_22 : f32 to vector<128x128xf32>
    %41 = arith.select %19, %26, %40 : vector<128x128xi1>, vector<128x128xf32>
    %cst_23 = arith.constant dense<0.000000e+00> : vector<128xf32>
    %42 = vector.multi_reduction <add>, %41, %cst_23 [0] : vector<128x128xf32> to vector<128xf32>
    %43 = vector.shape_cast %42 : vector<128xf32> to vector<1x128xf32>
    %44 = tpu.iota {dimensions = array<i32: 0>} : vector<8x128xi32>
    %c0_i32_24 = arith.constant 0 : i32
    %45 = vector.broadcast %c0_i32_24 : i32 to vector<8x128xi32>
    %46 = arith.cmpi eq, %44, %45 : vector<8x128xi32>
    %cst_25 = arith.constant 0.000000e+00 : f32
    %47 = vector.shape_cast %43 : vector<1x128xf32> to vector<1x128xf32>
    %48 = vector.broadcast %47 : vector<1x128xf32> to vector<8x128xf32>
    %49 = vector.broadcast %cst_25 : f32 to vector<8x128xf32>
    %50 = arith.select %46, %48, %49 : vector<8x128xi1>, vector<8x128xf32>
    %c0_26 = arith.constant 0 : index
    %c0_27 = arith.constant 0 : index
    %51 = vector.load %arg5[%c0_26, %c0_27] : memref<8x128xf32, #tpu.memory_space<vmem>>, vector<8x128xf32>
    tpu.vector_store %arg5[%c0_26, %c0_27], %50 {strides = array<i32>} : memref<8x128xf32, #tpu.memory_space<vmem>>, vector<8x128xf32>,
    %c0_i32_28 = arith.constant 0 : i32
    %52 = arith.cmpi eq, %arg1, %c0_i32_28 : i32
    %53 = arith.extui %52 : i1 to i32
    %c0_i32_29 = arith.constant 0 : i32
    %54 = arith.cmpi ne, %53, %c0_i32_29 : i32
    scf.if %54 {
      %55 = tpu.iota {dimensions = array<i32: 0>} : vector<128x1xi32>
      %56 = vector.broadcast %0 : i32 to vector<128x1xi32>
      %57 = arith.addi %56, %55 : vector<128x1xi32>
      %c8_i32_30 = arith.constant 8 : i32
      %58 = vector.broadcast %c8_i32_30 : i32 to vector<128x1xi32>
      %59 = arith.cmpi slt, %57, %58 : vector<128x1xi32>
      %c0_31 = arith.constant 0 : index
      %c0_32 = arith.constant 0 : index
      %60 = vector.load %arg7[%c0_31, %c0_32] : memref<128x1xf32, #tpu.memory_space<vmem>>, vector<128x1xf32>
      %61 = math.log %60 : vector<128x1xf32>
      %cst_33 = arith.constant 14.2857141 : f32
      %62 = vector.broadcast %cst_33 : f32 to vector<128x1xf32>
      %63 = arith.addf %61, %62 : vector<128x1xf32>
      %c0_34 = arith.constant 0 : index
      %c0_35 = arith.constant 0 : index
      %64 = vector.load %arg8[%c0_34, %c0_35] : memref<128x1xf32, #tpu.memory_space<vmem>>, vector<128x1xf32>
      %65 = arith.subf %63, %64 : vector<128x1xf32>
      %cst_36 = arith.constant 0.000000e+00 : f32
      %66 = vector.broadcast %cst_36 : f32 to vector<128x1xf32>
      %67 = arith.select %59, %65, %66 : vector<128x1xi1>, vector<128x1xf32>
      %68 = vector.shape_cast %67 : vector<128x1xf32> to vector<1x128x1xf32>
      %cst_37 = arith.constant dense<0.000000e+00> : vector<1xf32>
      %69 = vector.multi_reduction <add>, %68, %cst_37 [1, 2] : vector<1x128x1xf32> to vector<1xf32>
      %70 = vector.shape_cast %69 : vector<1xf32> to vector<1x1x1xf32>
      %71 = vector.extract %70[0, 0, 0] : f32 from vector<1x1x1xf32>
      %72 = vector.broadcast %71 : f32 to vector<1x1xf32>
      %c0_38 = arith.constant 0 : index
      %c0_39 = arith.constant 0 : index
      %73 = vector.load %arg8[%c0_38, %c0_39] : memref<128x1xf32, #tpu.memory_space<vmem>>, vector<128x1xf32>
      %cst_40 = arith.constant 0.000000e+00 : f32
      %74 = vector.broadcast %cst_40 : f32 to vector<128x1xf32>
      %75 = arith.select %59, %73, %74 : vector<128x1xi1>, vector<128x1xf32>
      %76 = vector.shape_cast %75 : vector<128x1xf32> to vector<1x128x1xf32>
      %cst_41 = arith.constant dense<0.000000e+00> : vector<1xf32>
      %77 = vector.multi_reduction <add>, %76, %cst_41 [1, 2] : vector<1x128x1xf32> to vector<1xf32>
      %78 = vector.shape_cast %77 : vector<1xf32> to vector<1x1x1xf32>
      %79 = vector.extract %78[0, 0, 0] : f32 from vector<1x1x1xf32>
      %80 = vector.broadcast %79 : f32 to vector<1x1xf32>
      %81 = tpu.iota {dimensions = array<i32: 0>} : vector<8x128xi32>
      %82 = tpu.iota {dimensions = array<i32: 1>} : vector<8x128xi32>
      %c0_i32_42 = arith.constant 0 : i32
      %83 = vector.broadcast %c0_i32_42 : i32 to vector<8x128xi32>
      %84 = arith.cmpi eq, %81, %83 : vector<8x128xi32>
      %c0_i32_43 = arith.constant 0 : i32
      %85 = vector.broadcast %c0_i32_43 : i32 to vector<8x128xi32>
      %86 = arith.cmpi eq, %82, %85 : vector<8x128xi32>
      %87 = arith.andi %84, %86 : vector<8x128xi1>
      %cst_44 = arith.constant 0.000000e+00 : f32
      %88 = vector.shape_cast %72 : vector<1x1xf32> to vector<1x1xf32>
      %89 = vector.broadcast %88 : vector<1x1xf32> to vector<8x128xf32>
      %90 = vector.broadcast %cst_44 : f32 to vector<8x128xf32>
      %91 = arith.select %87, %89, %90 : vector<8x128xi1>, vector<8x128xf32>
      %c0_i32_45 = arith.constant 0 : i32
      %92 = vector.broadcast %c0_i32_45 : i32 to vector<8x128xi32>
      %93 = arith.cmpi eq, %81, %92 : vector<8x128xi32>
      %c1_i32 = arith.constant 1 : i32
      %94 = vector.broadcast %c1_i32 : i32 to vector<8x128xi32>
      %95 = arith.cmpi eq, %82, %94 : vector<8x128xi32>
      %96 = arith.andi %93, %95 : vector<8x128xi1>
      %cst_46 = arith.constant 0.000000e+00 : f32
      %97 = vector.shape_cast %80 : vector<1x1xf32> to vector<1x1xf32>
      %98 = vector.broadcast %97 : vector<1x1xf32> to vector<8x128xf32>
      %99 = vector.broadcast %cst_46 : f32 to vector<8x128xf32>
      %100 = arith.select %96, %98, %99 : vector<8x128xi1>, vector<8x128xf32>
      %101 = arith.addf %91, %100 : vector<8x128xf32>
      %c0_47 = arith.constant 0 : index
      %c0_48 = arith.constant 0 : index
      %102 = vector.load %arg6[%c0_47, %c0_48] : memref<8x128xf32, #tpu.memory_space<vmem>>, vector<8x128xf32>
      tpu.vector_store %arg6[%c0_47, %c0_48], %101 {strides = array<i32>} : memref<8x128xf32, #tpu.memory_space<vmem>>, vector<8x128xf32>,
    } else {
    }
    return
  }
  func.func @transform_0(%arg0: i32, %arg1: i32) -> (i32, i32) {
    %c0_i32 = arith.constant 0 : i32
    %c0_i32_0 = arith.constant 0 : i32
    return %arg0, %c0_i32 : i32, i32
  }
  func.func @transform_1(%arg0: i32, %arg1: i32) -> (i32, i32) {
    %c0_i32 = arith.constant 0 : i32
    %c0_i32_0 = arith.constant 0 : i32
    return %arg1, %c0_i32 : i32, i32
  }
  func.func @transform_2(%arg0: i32, %arg1: i32) -> (i32, i32) {
    %c0_i32 = arith.constant 0 : i32
    return %arg0, %arg1 : i32, i32
  }
  func.func @transform_3(%arg0: i32, %arg1: i32) -> (i32, i32) {
    %c0_i32 = arith.constant 0 : i32
    return %arg0, %arg1 : i32, i32
  }
  func.func @transform_4(%arg0: i32, %arg1: i32) -> (i32, i32) {
    %c0_i32 = arith.constant 0 : i32
    %c0_i32_0 = arith.constant 0 : i32
    return %arg0, %c0_i32 : i32, i32
  }
}

</mosaic_0001>

<llo_original>
// kernel: tpu_custom_call.1
$region0: #{tpu_custom_call.1}
  #allocation0 [shape = 'u32[]', space=smem, size = 0x4, offset = 0x4, fixed_abs, tag = 'smem constant byte address 0x4 - core index']
  #allocation1 [shape = 'u32[144,128]{1,0:T(1,128)}', space=vmem, size = 0x12000, scoped, tag = 'internal scratch']
  #allocation2 [shape = 'f32[128,1]{1,0:T(8,128)}', space=vmem, size = 0x10000, scoped, tag = 'scratch operand']
  #allocation3 [shape = 'f32[128,1]{1,0:T(8,128)}', space=vmem, size = 0x10000, scoped, tag = 'scratch operand']
  %s0 = inlined_call_operand.hbm [shape: bf16[128,128], index: 0, kind: input, shape index: {}]
  %s1 = inlined_call_operand.hbm [shape: bf16[128,128], index: 1, kind: input, shape index: {}]
  %s2 = inlined_call_operand.hbm [shape: bf16[128,128], index: 2, kind: output, shape index: {0}]
  %s3 = inlined_call_operand.hbm [shape: f32[8,128], index: 3, kind: output, shape index: {1}]
  %s4 = inlined_call_operand.hbm [shape: f32[8,128], index: 4, kind: output, shape index: {2}]
  %5 = xla_tuple %s2, %s3, %s4
  %s6 = sld [smem:[#allocation0]]
  $region50: #{tpu_custom_call.1} parent=0
    _
  %s8 = ssub.s32 1, %s6
  %s9 = scalar_select 0, %s8, %s6
  $region1: #{tpu_custom_call.1} parent=0
    #allocation4 [shape = 'u8[32768]{0}', space=vmem, size = 0x8000, scoped, tag = 'input window, operand 0, single buffered']
    #allocation5 [shape = 's32[1]{0}', space=sflag, size = 0x4, scoped, tag = 'scoped memory for tpu_custom_call.1']
    #allocation6 [shape = 's32[1]{0}', space=sflag, size = 0x4, scoped, tag = 'scoped memory for tpu_custom_call.1']
    #allocation7 [shape = 'u8[32768]{0}', space=vmem, size = 0x8000, scoped, tag = 'input window, operand 1, single buffered']
    #allocation8 [shape = 's32[1]{0}', space=sflag, size = 0x4, scoped, tag = 'scoped memory for tpu_custom_call.1']
    #allocation9 [shape = 'u8[32768]{0}', space=vmem, size = 0x8000, scoped, tag = 'output window, operand 0, single buffered']
    #allocation10 [shape = 'u8[4096]{0}', space=vmem, size = 0x1000, scoped, tag = 'output window, operand 1, single buffered']
    #allocation11 [shape = 's32[1]{0}', space=sflag, size = 0x4, scoped, tag = 'scoped memory for tpu_custom_call.1']
    #allocation12 [shape = 'u8[4096]{0}', space=vmem, size = 0x1000, scoped, tag = 'output window, operand 2, single buffered']
    %10 = vsyncpa [#allocation5], 0
    %11 = vsyncpa [#allocation8], 0
    %12 = vsyncpa [#allocation6], 0
    %13 = vsyncpa [#allocation11], 0
    // Predicated region
    $region2: #{tpu_custom_call.1} parent=1 // pred_check
      _
    $region3: #{tpu_custom_call.1} parent=1 // pred_check_branch
      %15 = sbr.rel (0) target = $region5
    $region4: #{tpu_custom_call.1} parent=1 // pred_region
      %s17 = ssub.s32 1024, 1024
      %18 = vsyncadd [#allocation5], %s17
      %s19 = sshll.u32 [#allocation4], 4
      %s20 = int_to_ptr.vmem [resolvable:$true] %s19
      %25 = dma.hbm_to_vmem [thread:$0]  %s0, 1024, %s20, [#allocation5], 64, 64, 4
    $region5: #{tpu_custom_call.1} parent=1 // pred_fallthru
      _
    // Predicated region
    $region6: #{tpu_custom_call.1} parent=1 // pred_check
      _
    $region7: #{tpu_custom_call.1} parent=1 // pred_check_branch
      %27 = sbr.rel (0) target = $region9
    $region8: #{tpu_custom_call.1} parent=1 // pred_region
      %s29 = ssub.s32 1024, 1024
      %30 = vsyncadd [#allocation8], %s29
      %s31 = sshll.u32 [#allocation7], 4
      %s32 = int_to_ptr.vmem [resolvable:$true] %s31
      %37 = dma.hbm_to_vmem [thread:$0]  %s1, 1024, %s32, [#allocation8], 64, 64, 4
    $region9: #{tpu_custom_call.1} parent=1 // pred_fallthru
      _
    // Predicated region
    $region10: #{tpu_custom_call.1} parent=1 // pred_check
      _
    $region11: #{tpu_custom_call.1} parent=1 // pred_check_branch
      %39 = sbr.rel (0) target = $region13
    $region12: #{tpu_custom_call.1} parent=1 // pred_region
      %40 = dma.done [#allocation5], 1024
    $region13: #{tpu_custom_call.1} parent=1 // pred_fallthru
      _
    // Predicated region
    $region14: #{tpu_custom_call.1} parent=1 // pred_check
      _
    $region15: #{tpu_custom_call.1} parent=1 // pred_check_branch
      %42 = sbr.rel (0) target = $region17
    $region16: #{tpu_custom_call.1} parent=1 // pred_region
      %43 = dma.done [#allocation8], 1024
    $region17: #{tpu_custom_call.1} parent=1 // pred_fallthru
      _
    %s45 = smul.u32 0, 128
    %s46 = smul.u32 0, 128
    %p47 = scmp.eq.s32.totalorder 0, 0
    // Predicated region
    $region18: #{tpu_custom_call.1} parent=1 // pred_check
      %p48 = pneg %p47
    $region19: #{tpu_custom_call.1} parent=1 // pred_check_branch
      %50 = sbr.rel (%p48) target = $region21
    $region20: #{tpu_custom_call.1} parent=1 // pred_region
      %vm51 = vcmask 7168
      %52 = vst.msk [vmem:[#allocation2] sm:$0xff] %vm51, 0.0
      %53 = vst.msk [vmem:[#allocation2 + $0x8] sm:$0xff] %vm51, 0.0
      %54 = vst.msk [vmem:[#allocation2 + $0x10] sm:$0xff] %vm51, 0.0
      %55 = vst.msk [vmem:[#allocation2 + $0x18] sm:$0xff] %vm51, 0.0
      %56 = vst.msk [vmem:[#allocation2 + $0x20] sm:$0xff] %vm51, 0.0
      %57 = vst.msk [vmem:[#allocation2 + $0x28] sm:$0xff] %vm51, 0.0
      %58 = vst.msk [vmem:[#allocation2 + $0x30] sm:$0xff] %vm51, 0.0
      %59 = vst.msk [vmem:[#allocation2 + $0x38] sm:$0xff] %vm51, 0.0
      %60 = vst.msk [vmem:[#allocation2 + $0x40] sm:$0xff] %vm51, 0.0
      %61 = vst.msk [vmem:[#allocation2 + $0x48] sm:$0xff] %vm51, 0.0
      %62 = vst.msk [vmem:[#allocation2 + $0x50] sm:$0xff] %vm51, 0.0
      %63 = vst.msk [vmem:[#allocation2 + $0x58] sm:$0xff] %vm51, 0.0
      %64 = vst.msk [vmem:[#allocation2 + $0x60] sm:$0xff] %vm51, 0.0
      %65 = vst.msk [vmem:[#allocation2 + $0x68] sm:$0xff] %vm51, 0.0
      %66 = vst.msk [vmem:[#allocation2 + $0x70] sm:$0xff] %vm51, 0.0
      %67 = vst.msk [vmem:[#allocation2 + $0x78] sm:$0xff] %vm51, 0.0
      %68 = vst.msk [vmem:[#allocation3] sm:$0xff] %vm51, 0.0
      %69 = vst.msk [vmem:[#allocation3 + $0x8] sm:$0xff] %vm51, 0.0
      %70 = vst.msk [vmem:[#allocation3 + $0x10] sm:$0xff] %vm51, 0.0
      %71 = vst.msk [vmem:[#allocation3 + $0x18] sm:$0xff] %vm51, 0.0
      %72 = vst.msk [vmem:[#allocation3 + $0x20] sm:$0xff] %vm51, 0.0
      %73 = vst.msk [vmem:[#allocation3 + $0x28] sm:$0xff] %vm51, 0.0
      %74 = vst.msk [vmem:[#allocation3 + $0x30] sm:$0xff] %vm51, 0.0
      %75 = vst.msk [vmem:[#allocation3 + $0x38] sm:$0xff] %vm51, 0.0
      %76 = vst.msk [vmem:[#allocation3 + $0x40] sm:$0xff] %vm51, 0.0
      %77 = vst.msk [vmem:[#allocation3 + $0x48] sm:$0xff] %vm51, 0.0
      %78 = vst.msk [vmem:[#allocation3 + $0x50] sm:$0xff] %vm51, 0.0
      %79 = vst.msk [vmem:[#allocation3 + $0x58] sm:$0xff] %vm51, 0.0
      %80 = vst.msk [vmem:[#allocation3 + $0x60] sm:$0xff] %vm51, 0.0
      %81 = vst.msk [vmem:[#allocation3 + $0x68] sm:$0xff] %vm51, 0.0
      %82 = vst.msk [vmem:[#allocation3 + $0x70] sm:$0xff] %vm51, 0.0
      %83 = vst.msk [vmem:[#allocation3 + $0x78] sm:$0xff] %vm51, 0.0
    $region21: #{tpu_custom_call.1} parent=1 // pred_fallthru
      _
    %v84 = vld [vmem:[#allocation4] sm:$0xf]
    %v85 = vld [vmem:[#allocation4 + $0x4] sm:$0xf]
    %v86 = vld [vmem:[#allocation4 + $0x8] sm:$0xf]
    %v87 = vld [vmem:[#allocation4 + $0xc] sm:$0xf]
    %v88 = vld [vmem:[#allocation4 + $0x10] sm:$0xf]
    %v89 = vld [vmem:[#allocation4 + $0x14] sm:$0xf]
    %v90 = vld [vmem:[#allocation4 + $0x18] sm:$0xf]
    %v91 = vld [vmem:[#allocation4 + $0x1c] sm:$0xf]
    %v92 = vld [vmem:[#allocation4 + $0x20] sm:$0xf]
    %v93 = vld [vmem:[#allocation4 + $0x24] sm:$0xf]
    %v94 = vld [vmem:[#allocation4 + $0x28] sm:$0xf]
    %v95 = vld [vmem:[#allocation4 + $0x2c] sm:$0xf]
    %v96 = vld [vmem:[#allocation4 + $0x30] sm:$0xf]
    %v97 = vld [vmem:[#allocation4 + $0x34] sm:$0xf]
    %v98 = vld [vmem:[#allocation4 + $0x38] sm:$0xf]
    %v99 = vld [vmem:[#allocation4 + $0x3c] sm:$0xf]
    %v100 = vld [vmem:[#allocation7] sm:$0xf]
    %v101 = vld [vmem:[#allocation7 + $0x4] sm:$0xf]
    %v102 = vld [vmem:[#allocation7 + $0x8] sm:$0xf]
    %v103 = vld [vmem:[#allocation7 + $0xc] sm:$0xf]
    %v104 = vld [vmem:[#allocation7 + $0x10] sm:$0xf]
    %v105 = vld [vmem:[#allocation7 + $0x14] sm:$0xf]
    %v106 = vld [vmem:[#allocation7 + $0x18] sm:$0xf]
    %v107 = vld [vmem:[#allocation7 + $0x1c] sm:$0xf]
    %v108 = vld [vmem:[#allocation7 + $0x20] sm:$0xf]
    %v109 = vld [vmem:[#allocation7 + $0x24] sm:$0xf]
    %v110 = vld [vmem:[#allocation7 + $0x28] sm:$0xf]
    %v111 = vld [vmem:[#allocation7 + $0x2c] sm:$0xf]
    %v112 = vld [vmem:[#allocation7 + $0x30] sm:$0xf]
    %v113 = vld [vmem:[#allocation7 + $0x34] sm:$0xf]
    %v114 = vld [vmem:[#allocation7 + $0x38] sm:$0xf]
    %v115 = vld [vmem:[#allocation7 + $0x3c] sm:$0xf]
    %v132 = vunpack.c.l.b16 %v84
    %v133 = vunpack.c.l.b16 %v85
    %v134 = vunpack.c.l.b16 %v86
    %v135 = vunpack.c.l.b16 %v87
    %v136 = vunpack.c.l.b16 %v88
    %v137 = vunpack.c.l.b16 %v89
    %v138 = vunpack.c.l.b16 %v90
    %v139 = vunpack.c.l.b16 %v91
    %v140 = vunpack.c.l.b16 %v92
    %v141 = vunpack.c.l.b16 %v93
    %v142 = vunpack.c.l.b16 %v94
    %v143 = vunpack.c.l.b16 %v95
    %v144 = vunpack.c.l.b16 %v96
    %v145 = vunpack.c.l.b16 %v97
    %v146 = vunpack.c.l.b16 %v98
    %v147 = vunpack.c.l.b16 %v99
    %v148 = vpack.c.b16 %v133, %v132
    %v149 = vpack.c.b16 %v135, %v134
    %v150 = vpack.c.b16 %v137, %v136
    %v151 = vpack.c.b16 %v139, %v138
    %v152 = vpack.c.b16 %v141, %v140
    %v153 = vpack.c.b16 %v143, %v142
    %v154 = vpack.c.b16 %v145, %v144
    %v155 = vpack.c.b16 %v147, %v146
    %v180 = vunpack.c.l.b16 %v100
    %v181 = vunpack.c.l.b16 %v101
    %v182 = vunpack.c.l.b16 %v102
    %v183 = vunpack.c.l.b16 %v103
    %v184 = vunpack.c.l.b16 %v104
    %v185 = vunpack.c.l.b16 %v105
    %v186 = vunpack.c.l.b16 %v106
    %v187 = vunpack.c.l.b16 %v107
    %v188 = vunpack.c.l.b16 %v108
    %v189 = vunpack.c.l.b16 %v109
    %v190 = vunpack.c.l.b16 %v110
    %v191 = vunpack.c.l.b16 %v111
    %v192 = vunpack.c.l.b16 %v112
    %v193 = vunpack.c.l.b16 %v113
    %v194 = vunpack.c.l.b16 %v114
    %v195 = vunpack.c.l.b16 %v115
    %v196 = vpack.c.b16 %v181, %v180
    %v197 = vpack.c.b16 %v183, %v182
    %v198 = vpack.c.b16 %v185, %v184
    %v199 = vpack.c.b16 %v187, %v186
    %v200 = vpack.c.b16 %v189, %v188
    %v201 = vpack.c.b16 %v191, %v190
    %v202 = vpack.c.b16 %v193, %v192
    %v203 = vpack.c.b16 %v195, %v194
    %212 = vmatprep.subr.bf16.mxu0 0
    %213 = vmatpush1.bf16.xpose.msra.mxu0 %v196
    %214 = vmatprep.subr.bf16.mxu0 0
    %215 = vmatpush1.bf16.xpose.msra.mxu0 %v197
    %216 = vmatprep.subr.bf16.mxu0 0
    %217 = vmatpush1.bf16.xpose.msra.mxu0 %v198
    %218 = vmatprep.subr.bf16.mxu0 0
    %219 = vmatpush1.bf16.xpose.msra.mxu0 %v199
    %220 = vmatprep.subr.bf16.mxu0 0
    %221 = vmatpush1.bf16.xpose.msra.mxu0 %v200
    %222 = vmatprep.subr.bf16.mxu0 0
    %223 = vmatpush1.bf16.xpose.msra.mxu0 %v201
    %224 = vmatprep.subr.bf16.mxu0 0
    %225 = vmatpush1.bf16.xpose.msra.mxu0 %v202
    %226 = vmatprep.subr.bf16.mxu0 0
    %227 = vmatpush1.bf16.xpose.msra.mxu0 %v203
    %228 = vmatprep.subr.bf16.mxu0 0
    %229 = vmatpush1.bf16.xpose.msra.mxu0 0
    %230 = vmatprep.subr.bf16.mxu0 0
    %231 = vmatpush1.bf16.xpose.msra.mxu0 0
    %232 = vmatprep.subr.bf16.mxu0 0
    %233 = vmatpush1.bf16.xpose.msra.mxu0 0
    %234 = vmatprep.subr.bf16.mxu0 0
    %235 = vmatpush1.bf16.xpose.msra.mxu0 0
    %236 = vmatprep.subr.bf16.mxu0 0
    %237 = vmatpush1.bf16.xpose.msra.mxu0 0
    %238 = vmatprep.subr.bf16.mxu0 0
    %239 = vmatpush1.bf16.xpose.msra.mxu0 0
    %240 = vmatprep.subr.bf16.mxu0 0
    %241 = vmatpush1.bf16.xpose.msra.mxu0 0
    %242 = vmatprep.subr.bf16.mxu0 0
    %243 = vmatpush1.bf16.xpose.msra.mxu0 0
    %244 = vmatprep.mubr.bf16.mxu0 0
    %245 = vmatmul.mubr.bf16.gmra.mrb[0].mxu0 %v148
    %v246 = vpop.f32.mrb[0].mxu0
    %v247 = vadd.f32 0.0, %v246
    %v248 = vpop.f32.mrb[0].mxu0
    %v249 = vpop.f32.mrb[0].mxu0
    %v250 = vadd.f32 0.0, %v249
    %v251 = vpop.f32.mrb[0].mxu0
    %252 = vmatprep.mubr.bf16.mxu0 0
    %253 = vmatmul.mubr.bf16.gmra.mrb[0].mxu0 %v149
    %v254 = vpop.f32.mrb[0].mxu0
    %v255 = vadd.f32 0.0, %v254
    %v256 = vpop.f32.mrb[0].mxu0
    %v257 = vpop.f32.mrb[0].mxu0
    %v258 = vadd.f32 0.0, %v257
    %v259 = vpop.f32.mrb[0].mxu0
    %260 = vmatprep.mubr.bf16.mxu0 0
    %261 = vmatmul.mubr.bf16.gmra.mrb[0].mxu0 %v150
    %v262 = vpop.f32.mrb[0].mxu0
    %v263 = vadd.f32 0.0, %v262
    %v264 = vpop.f32.mrb[0].mxu0
    %v265 = vpop.f32.mrb[0].mxu0
    %v266 = vadd.f32 0.0, %v265
    %v267 = vpop.f32.mrb[0].mxu0
    %268 = vmatprep.mubr.bf16.mxu0 0
    %269 = vmatmul.mubr.bf16.gmra.mrb[0].mxu0 %v151
    %v270 = vpop.f32.mrb[0].mxu0
    %v271 = vadd.f32 0.0, %v270
    %v272 = vpop.f32.mrb[0].mxu0
    %v273 = vpop.f32.mrb[0].mxu0
    %v274 = vadd.f32 0.0, %v273
    %v275 = vpop.f32.mrb[0].mxu0
    %276 = vmatprep.mubr.bf16.mxu0 0
    %277 = vmatmul.mubr.bf16.gmra.mrb[0].mxu0 %v152
    %v278 = vpop.f32.mrb[0].mxu0
    %v279 = vadd.f32 0.0, %v278
    %v280 = vpop.f32.mrb[0].mxu0
    %v281 = vpop.f32.mrb[0].mxu0
    %v282 = vadd.f32 0.0, %v281
    %v283 = vpop.f32.mrb[0].mxu0
    %284 = vmatprep.mubr.bf16.mxu0 0
    %285 = vmatmul.mubr.bf16.gmra.mrb[0].mxu0 %v153
    %v286 = vpop.f32.mrb[0].mxu0
    %v287 = vadd.f32 0.0, %v286
    %v288 = vpop.f32.mrb[0].mxu0
    %v289 = vpop.f32.mrb[0].mxu0
    %v290 = vadd.f32 0.0, %v289
    %v291 = vpop.f32.mrb[0].mxu0
    %292 = vmatprep.mubr.bf16.mxu0 0
    %293 = vmatmul.mubr.bf16.gmra.mrb[0].mxu0 %v154
    %v294 = vpop.f32.mrb[0].mxu0
    %v295 = vadd.f32 0.0, %v294
    %v296 = vpop.f32.mrb[0].mxu0
    %v297 = vpop.f32.mrb[0].mxu0
    %v298 = vadd.f32 0.0, %v297
    %v299 = vpop.f32.mrb[0].mxu0
    %300 = vmatprep.mubr.bf16.mxu0 0
    %301 = vmatmul.mubr.bf16.gmra.mrb[0].mxu0 %v155
    %v302 = vpop.f32.mrb[0].mxu0
    %v303 = vadd.f32 0.0, %v302
    %v304 = vpop.f32.mrb[0].mxu0
    %v305 = vpop.f32.mrb[0].mxu0
    %v306 = vadd.f32 0.0, %v305
    %v307 = vpop.f32.mrb[0].mxu0
    %308 = vdwg.mxu0
    %v309 = vmul.f32 %v247, 14.285714
    %v310 = vmul.f32 %v250, 14.285714
    %v311 = vmul.f32 %v255, 14.285714
    %v312 = vmul.f32 %v258, 14.285714
    %v313 = vmul.f32 %v263, 14.285714
    %v314 = vmul.f32 %v266, 14.285714
    %v315 = vmul.f32 %v271, 14.285714
    %v316 = vmul.f32 %v274, 14.285714
    %v317 = vmul.f32 %v279, 14.285714
    %v318 = vmul.f32 %v282, 14.285714
    %v319 = vmul.f32 %v287, 14.285714
    %v320 = vmul.f32 %v290, 14.285714
    %v321 = vmul.f32 %v295, 14.285714
    %v322 = vmul.f32 %v298, 14.285714
    %v323 = vmul.f32 %v303, 14.285714
    %v324 = vmul.f32 %v306, 14.285714
    %v325 = vpack.c.bf16 %v310, %v309
    %v326 = vpack.c.bf16 %v312, %v311
    %v327 = vpack.c.bf16 %v314, %v313
    %v328 = vpack.c.bf16 %v316, %v315
    %v329 = vpack.c.bf16 %v318, %v317
    %v330 = vpack.c.bf16 %v320, %v319
    %v331 = vpack.c.bf16 %v322, %v321
    %v332 = vpack.c.bf16 %v324, %v323
    %v341 = vunpack.c.l.b16 %v325
    %v342 = vunpack.c.h.b16 %v325
    %v343 = vunpack.c.l.b16 %v326
    %v344 = vunpack.c.h.b16 %v326
    %v345 = vunpack.c.l.b16 %v327
    %v346 = vunpack.c.h.b16 %v327
    %v347 = vunpack.c.l.b16 %v328
    %v348 = vunpack.c.h.b16 %v328
    %v349 = vunpack.c.l.b16 %v329
    %v350 = vunpack.c.h.b16 %v329
    %v351 = vunpack.c.l.b16 %v330
    %v352 = vunpack.c.h.b16 %v330
    %v353 = vunpack.c.l.b16 %v331
    %v354 = vunpack.c.h.b16 %v331
    %v355 = vunpack.c.l.b16 %v332
    %v356 = vunpack.c.h.b16 %v332
    %v357 = vpack.c.b16 %v341, %v341
    %v358 = vpack.c.b16 %v342, %v342
    %v359 = vpack.c.b16 %v343, %v343
    %v360 = vpack.c.b16 %v344, %v344
    %v361 = vpack.c.b16 %v345, %v345
    %v362 = vpack.c.b16 %v346, %v346
    %v363 = vpack.c.b16 %v347, %v347
    %v364 = vpack.c.b16 %v348, %v348
    %v365 = vpack.c.b16 %v349, %v349
    %v366 = vpack.c.b16 %v350, %v350
    %v367 = vpack.c.b16 %v351, %v351
    %v368 = vpack.c.b16 %v352, %v352
    %v369 = vpack.c.b16 %v353, %v353
    %v370 = vpack.c.b16 %v354, %v354
    %v371 = vpack.c.b16 %v355, %v355
    %v372 = vpack.c.b16 %v356, %v356
    %389 = vst [vmem:[#allocation9] sm:$0xf] %v357
    %390 = vst [vmem:[#allocation9 + $0x4] sm:$0xf] %v358
    %391 = vst [vmem:[#allocation9 + $0x8] sm:$0xf] %v359
    %392 = vst [vmem:[#allocation9 + $0xc] sm:$0xf] %v360
    %393 = vst [vmem:[#allocation9 + $0x10] sm:$0xf] %v361
    %394 = vst [vmem:[#allocation9 + $0x14] sm:$0xf] %v362
    %395 = vst [vmem:[#allocation9 + $0x18] sm:$0xf] %v363
    %396 = vst [vmem:[#allocation9 + $0x1c] sm:$0xf] %v364
    %397 = vst [vmem:[#allocation9 + $0x20] sm:$0xf] %v365
    %398 = vst [vmem:[#allocation9 + $0x24] sm:$0xf] %v366
    %399 = vst [vmem:[#allocation9 + $0x28] sm:$0xf] %v367
    %400 = vst [vmem:[#allocation9 + $0x2c] sm:$0xf] %v368
    %401 = vst [vmem:[#allocation9 + $0x30] sm:$0xf] %v369
    %402 = vst [vmem:[#allocation9 + $0x34] sm:$0xf] %v370
    %403 = vst [vmem:[#allocation9 + $0x38] sm:$0xf] %v371
    %404 = vst [vmem:[#allocation9 + $0x3c] sm:$0xf] %v372
    %v405 = vlaneseq
    %v406 = vshrl.u32 %v405, 7
    %v407 = vadd.s32 %v406, 8
    %v408 = vadd.s32 %v406, 16
    %v409 = vadd.s32 %v406, 24
    %v410 = vadd.s32 %v406, 32
    %v411 = vadd.s32 %v406, 40
    %v412 = vadd.s32 %v406, 48
    %v413 = vadd.s32 %v406, 56
    %v414 = vadd.s32 %v406, 64
    %v415 = vadd.s32 %v406, 72
    %v416 = vadd.s32 %v406, 80
    %v417 = vadd.s32 %v406, 88
    %v418 = vadd.s32 %v406, 96
    %v419 = vadd.s32 %v406, 104
    %v420 = vadd.s32 %v406, 112
    %v421 = vadd.s32 %v406, 120
    %v422 = vstv %s45
    %v423 = vadd.s32 %v422, %v406
    %v424 = vadd.s32 %v422, %v407
    %v425 = vadd.s32 %v422, %v408
    %v426 = vadd.s32 %v422, %v409
    %v427 = vadd.s32 %v422, %v410
    %v428 = vadd.s32 %v422, %v411
    %v429 = vadd.s32 %v422, %v412
    %v430 = vadd.s32 %v422, %v413
    %v431 = vadd.s32 %v422, %v414
    %v432 = vadd.s32 %v422, %v415
    %v433 = vadd.s32 %v422, %v416
    %v434 = vadd.s32 %v422, %v417
    %v435 = vadd.s32 %v422, %v418
    %v436 = vadd.s32 %v422, %v419
    %v437 = vadd.s32 %v422, %v420
    %v438 = vadd.s32 %v422, %v421
    %v439 = vlaneseq
    %v440 = vand.u32 %v439, 127
    %v441 = vstv %s46
    %v442 = vadd.s32 %v441, %v440
    %vm443 = vcmp.lt.s32.totalorder %v423, 8
    %vm444 = vcmp.lt.s32.totalorder %v424, 8
    %vm445 = vcmp.lt.s32.totalorder %v425, 8
    %vm446 = vcmp.lt.s32.totalorder %v426, 8
    %vm447 = vcmp.lt.s32.totalorder %v427, 8
    %vm448 = vcmp.lt.s32.totalorder %v428, 8
    %vm449 = vcmp.lt.s32.totalorder %v429, 8
    %vm450 = vcmp.lt.s32.totalorder %v430, 8
    %vm451 = vcmp.lt.s32.totalorder %v431, 8
    %vm452 = vcmp.lt.s32.totalorder %v432, 8
    %vm453 = vcmp.lt.s32.totalorder %v433, 8
    %vm454 = vcmp.lt.s32.totalorder %v434, 8
    %vm455 = vcmp.lt.s32.totalorder %v435, 8
    %vm456 = vcmp.lt.s32.totalorder %v436, 8
    %vm457 = vcmp.lt.s32.totalorder %v437, 8
    %vm458 = vcmp.lt.s32.totalorder %v438, 8
    %vm459 = vcmp.lt.s32.totalorder %v442, 8
    %v460 = vsub.f32 %v309, 14.285714
    %v461 = vsub.f32 %v310, 14.285714
    %v462 = vsub.f32 %v311, 14.285714
    %v463 = vsub.f32 %v312, 14.285714
    %v464 = vsub.f32 %v313, 14.285714
    %v465 = vsub.f32 %v314, 14.285714
    %v466 = vsub.f32 %v315, 14.285714
    %v467 = vsub.f32 %v316, 14.285714
    %v468 = vsub.f32 %v317, 14.285714
    %v469 = vsub.f32 %v318, 14.285714
    %v470 = vsub.f32 %v319, 14.285714
    %v471 = vsub.f32 %v320, 14.285714
    %v472 = vsub.f32 %v321, 14.285714
    %v473 = vsub.f32 %v322, 14.285714
    %v474 = vsub.f32 %v323, 14.285714
    %v475 = vsub.f32 %v324, 14.285714
    %v476 = vmul.f32 %v460, 1.442695
    %v477 = vpow.pop %v476
    %v478 = vmul.f32 %v461, 1.442695
    %v479 = vpow.pop %v478
    %v480 = vmul.f32 %v462, 1.442695
    %v481 = vpow.pop %v480
    %v482 = vmul.f32 %v463, 1.442695
    %v483 = vpow.pop %v482
    %v484 = vmul.f32 %v464, 1.442695
    %v485 = vpow.pop %v484
    %v486 = vmul.f32 %v465, 1.442695
    %v487 = vpow.pop %v486
    %v488 = vmul.f32 %v466, 1.442695
    %v489 = vpow.pop %v488
    %v490 = vmul.f32 %v467, 1.442695
    %v491 = vpow.pop %v490
    %v492 = vmul.f32 %v468, 1.442695
    %v493 = vpow.pop %v492
    %v494 = vmul.f32 %v469, 1.442695
    %v495 = vpow.pop %v494
    %v496 = vmul.f32 %v470, 1.442695
    %v497 = vpow.pop %v496
    %v498 = vmul.f32 %v471, 1.442695
    %v499 = vpow.pop %v498
    %v500 = vmul.f32 %v472, 1.442695
    %v501 = vpow.pop %v500
    %v502 = vmul.f32 %v473, 1.442695
    %v503 = vpow.pop %v502
    %v504 = vmul.f32 %v474, 1.442695
    %v505 = vpow.pop %v504
    %v506 = vmul.f32 %v475, 1.442695
    %v507 = vpow.pop %v506
    %v508 = vsel %vm459, %v477, 0.0
    %v509 = vsel %vm459, %v479, 0.0
    %v510 = vsel %vm459, %v481, 0.0
    %v511 = vsel %vm459, %v483, 0.0
    %v512 = vsel %vm459, %v485, 0.0
    %v513 = vsel %vm459, %v487, 0.0
    %v514 = vsel %vm459, %v489, 0.0
    %v515 = vsel %vm459, %v491, 0.0
    %v516 = vsel %vm459, %v493, 0.0
    %v517 = vsel %vm459, %v495, 0.0
    %v518 = vsel %vm459, %v497, 0.0
    %v519 = vsel %vm459, %v499, 0.0
    %v520 = vsel %vm459, %v501, 0.0
    %v521 = vsel %vm459, %v503, 0.0
    %v522 = vsel %vm459, %v505, 0.0
    %v523 = vsel %vm459, %v507, 0.0
    %v524 = vld [vmem:[#allocation2] sm:$0xff]
    %v525 = vld [vmem:[#allocation2 + $0x8] sm:$0xff]
    %v526 = vld [vmem:[#allocation2 + $0x10] sm:$0xff]
    %v527 = vld [vmem:[#allocation2 + $0x18] sm:$0xff]
    %v528 = vld [vmem:[#allocation2 + $0x20] sm:$0xff]
    %v529 = vld [vmem:[#allocation2 + $0x28] sm:$0xff]
    %v530 = vld [vmem:[#allocation2 + $0x30] sm:$0xff]
    %v531 = vld [vmem:[#allocation2 + $0x38] sm:$0xff]
    %v532 = vld [vmem:[#allocation2 + $0x40] sm:$0xff]
    %v533 = vld [vmem:[#allocation2 + $0x48] sm:$0xff]
    %v534 = vld [vmem:[#allocation2 + $0x50] sm:$0xff]
    %v535 = vld [vmem:[#allocation2 + $0x58] sm:$0xff]
    %v536 = vld [vmem:[#allocation2 + $0x60] sm:$0xff]
    %v537 = vld [vmem:[#allocation2 + $0x68] sm:$0xff]
    %v538 = vld [vmem:[#allocation2 + $0x70] sm:$0xff]
    %v539 = vld [vmem:[#allocation2 + $0x78] sm:$0xff]
    %540 = vadd.xlane.f32.xlu0 %v508
    %v541 = vpop.xlane.xlu0 %540
    %542 = vadd.xlane.f32.xlu0 %v509
    %v543 = vpop.xlane.xlu0 %542
    %544 = vadd.xlane.f32.xlu0 %v510
    %v545 = vpop.xlane.xlu0 %544
    %546 = vadd.xlane.f32.xlu0 %v511
    %v547 = vpop.xlane.xlu0 %546
    %548 = vadd.xlane.f32.xlu0 %v512
    %v549 = vpop.xlane.xlu0 %548
    %550 = vadd.xlane.f32.xlu0 %v513
    %v551 = vpop.xlane.xlu0 %550
    %552 = vadd.xlane.f32.xlu0 %v514
    %v553 = vpop.xlane.xlu0 %552
    %554 = vadd.xlane.f32.xlu0 %v515
    %v555 = vpop.xlane.xlu0 %554
    %556 = vadd.xlane.f32.xlu0 %v516
    %v557 = vpop.xlane.xlu0 %556
    %558 = vadd.xlane.f32.xlu0 %v517
    %v559 = vpop.xlane.xlu0 %558
    %560 = vadd.xlane.f32.xlu0 %v518
    %v561 = vpop.xlane.xlu0 %560
    %562 = vadd.xlane.f32.xlu0 %v519
    %v563 = vpop.xlane.xlu0 %562
    %564 = vadd.xlane.f32.xlu0 %v520
    %v565 = vpop.xlane.xlu0 %564
    %566 = vadd.xlane.f32.xlu0 %v521
    %v567 = vpop.xlane.xlu0 %566
    %568 = vadd.xlane.f32.xlu0 %v522
    %v569 = vpop.xlane.xlu0 %568
    %570 = vadd.xlane.f32.xlu0 %v523
    %v571 = vpop.xlane.xlu0 %570
    %v572 = vadd.f32 %v524, %v541
    %v573 = vadd.f32 %v525, %v543
    %v574 = vadd.f32 %v526, %v545
    %v575 = vadd.f32 %v527, %v547
    %v576 = vadd.f32 %v528, %v549
    %v577 = vadd.f32 %v529, %v551
    %v578 = vadd.f32 %v530, %v553
    %v579 = vadd.f32 %v531, %v555
    %v580 = vadd.f32 %v532, %v557
    %v581 = vadd.f32 %v533, %v559
    %v582 = vadd.f32 %v534, %v561
    %v583 = vadd.f32 %v535, %v563
    %v584 = vadd.f32 %v536, %v565
    %v585 = vadd.f32 %v537, %v567
    %v586 = vadd.f32 %v538, %v569
    %v587 = vadd.f32 %v539, %v571
    %vm588 = vcmask 7168
    %589 = vst.msk [vmem:[#allocation2] sm:$0xff] %vm588, %v572
    %590 = vst.msk [vmem:[#allocation2 + $0x8] sm:$0xff] %vm588, %v573
    %591 = vst.msk [vmem:[#allocation2 + $0x10] sm:$0xff] %vm588, %v574
    %592 = vst.msk [vmem:[#allocation2 + $0x18] sm:$0xff] %vm588, %v575
    %593 = vst.msk [vmem:[#allocation2 + $0x20] sm:$0xff] %vm588, %v576
    %594 = vst.msk [vmem:[#allocation2 + $0x28] sm:$0xff] %vm588, %v577
    %595 = vst.msk [vmem:[#allocation2 + $0x30] sm:$0xff] %vm588, %v578
    %596 = vst.msk [vmem:[#allocation2 + $0x38] sm:$0xff] %vm588, %v579
    %597 = vst.msk [vmem:[#allocation2 + $0x40] sm:$0xff] %vm588, %v580
    %598 = vst.msk [vmem:[#allocation2 + $0x48] sm:$0xff] %vm588, %v581
    %599 = vst.msk [vmem:[#allocation2 + $0x50] sm:$0xff] %vm588, %v582
    %600 = vst.msk [vmem:[#allocation2 + $0x58] sm:$0xff] %vm588, %v583
    %601 = vst.msk [vmem:[#allocation2 + $0x60] sm:$0xff] %vm588, %v584
    %602 = vst.msk [vmem:[#allocation2 + $0x68] sm:$0xff] %vm588, %v585
    %603 = vst.msk [vmem:[#allocation2 + $0x70] sm:$0xff] %vm588, %v586
    %604 = vst.msk [vmem:[#allocation2 + $0x78] sm:$0xff] %vm588, %v587
    %v605 = vld [vmem:[#allocation3] sm:$0xff]
    %v606 = vld [vmem:[#allocation3 + $0x8] sm:$0xff]
    %v607 = vld [vmem:[#allocation3 + $0x10] sm:$0xff]
    %v608 = vld [vmem:[#allocation3 + $0x18] sm:$0xff]
    %v609 = vld [vmem:[#allocation3 + $0x20] sm:$0xff]
    %v610 = vld [vmem:[#allocation3 + $0x28] sm:$0xff]
    %v611 = vld [vmem:[#allocation3 + $0x30] sm:$0xff]
    %v612 = vld [vmem:[#allocation3 + $0x38] sm:$0xff]
    %v613 = vld [vmem:[#allocation3 + $0x40] sm:$0xff]
    %v614 = vld [vmem:[#allocation3 + $0x48] sm:$0xff]
    %v615 = vld [vmem:[#allocation3 + $0x50] sm:$0xff]
    %v616 = vld [vmem:[#allocation3 + $0x58] sm:$0xff]
    %v617 = vld [vmem:[#allocation3 + $0x60] sm:$0xff]
    %v618 = vld [vmem:[#allocation3 + $0x68] sm:$0xff]
    %v619 = vld [vmem:[#allocation3 + $0x70] sm:$0xff]
    %v620 = vld [vmem:[#allocation3 + $0x78] sm:$0xff]
    %vm621 = vcmp.eq.s32.totalorder %v423, %v442
    %vm622 = vcmp.eq.s32.totalorder %v424, %v442
    %vm623 = vcmp.eq.s32.totalorder %v425, %v442
    %vm624 = vcmp.eq.s32.totalorder %v426, %v442
    %vm625 = vcmp.eq.s32.totalorder %v427, %v442
    %vm626 = vcmp.eq.s32.totalorder %v428, %v442
    %vm627 = vcmp.eq.s32.totalorder %v429, %v442
    %vm628 = vcmp.eq.s32.totalorder %v430, %v442
    %vm629 = vcmp.eq.s32.totalorder %v431, %v442
    %vm630 = vcmp.eq.s32.totalorder %v432, %v442
    %vm631 = vcmp.eq.s32.totalorder %v433, %v442
    %vm632 = vcmp.eq.s32.totalorder %v434, %v442
    %vm633 = vcmp.eq.s32.totalorder %v435, %v442
    %vm634 = vcmp.eq.s32.totalorder %v436, %v442
    %vm635 = vcmp.eq.s32.totalorder %v437, %v442
    %vm636 = vcmp.eq.s32.totalorder %v438, %v442
    %v637 = vsel %vm621, %v309, 0.0
    %v638 = vsel %vm622, %v310, 0.0
    %v639 = vsel %vm623, %v311, 0.0
    %v640 = vsel %vm624, %v312, 0.0
    %v641 = vsel %vm625, %v313, 0.0
    %v642 = vsel %vm626, %v314, 0.0
    %v643 = vsel %vm627, %v315, 0.0
    %v644 = vsel %vm628, %v316, 0.0
    %v645 = vsel %vm629, %v317, 0.0
    %v646 = vsel %vm630, %v318, 0.0
    %v647 = vsel %vm631, %v319, 0.0
    %v648 = vsel %vm632, %v320, 0.0
    %v649 = vsel %vm633, %v321, 0.0
    %v650 = vsel %vm634, %v322, 0.0
    %v651 = vsel %vm635, %v323, 0.0
    %v652 = vsel %vm636, %v324, 0.0
    %653 = vadd.xlane.f32.xlu0 %v637
    %v654 = vpop.xlane.xlu0 %653
    %655 = vadd.xlane.f32.xlu0 %v638
    %v656 = vpop.xlane.xlu0 %655
    %657 = vadd.xlane.f32.xlu0 %v639
    %v658 = vpop.xlane.xlu0 %657
    %659 = vadd.xlane.f32.xlu0 %v640
    %v660 = vpop.xlane.xlu0 %659
    %661 = vadd.xlane.f32.xlu0 %v641
    %v662 = vpop.xlane.xlu0 %661
    %663 = vadd.xlane.f32.xlu0 %v642
    %v664 = vpop.xlane.xlu0 %663
    %665 = vadd.xlane.f32.xlu0 %v643
    %v666 = vpop.xlane.xlu0 %665
    %667 = vadd.xlane.f32.xlu0 %v644
    %v668 = vpop.xlane.xlu0 %667
    %669 = vadd.xlane.f32.xlu0 %v645
    %v670 = vpop.xlane.xlu0 %669
    %671 = vadd.xlane.f32.xlu0 %v646
    %v672 = vpop.xlane.xlu0 %671
    %673 = vadd.xlane.f32.xlu0 %v647
    %v674 = vpop.xlane.xlu0 %673
    %675 = vadd.xlane.f32.xlu0 %v648
    %v676 = vpop.xlane.xlu0 %675
    %677 = vadd.xlane.f32.xlu0 %v649
    %v678 = vpop.xlane.xlu0 %677
    %679 = vadd.xlane.f32.xlu0 %v650
    %v680 = vpop.xlane.xlu0 %679
    %681 = vadd.xlane.f32.xlu0 %v651
    %v682 = vpop.xlane.xlu0 %681
    %683 = vadd.xlane.f32.xlu0 %v652
    %v684 = vpop.xlane.xlu0 %683
    %v685 = vadd.f32 %v605, %v654
    %v686 = vadd.f32 %v606, %v656
    %v687 = vadd.f32 %v607, %v658
    %v688 = vadd.f32 %v608, %v660
    %v689 = vadd.f32 %v609, %v662
    %v690 = vadd.f32 %v610, %v664
    %v691 = vadd.f32 %v611, %v666
    %v692 = vadd.f32 %v612, %v668
    %v693 = vadd.f32 %v613, %v670
    %v694 = vadd.f32 %v614, %v672
    %v695 = vadd.f32 %v615, %v674
    %v696 = vadd.f32 %v616, %v676
    %v697 = vadd.f32 %v617, %v678
    %v698 = vadd.f32 %v618, %v680
    %v699 = vadd.f32 %v619, %v682
    %v700 = vadd.f32 %v620, %v684
    %701 = vst.msk [vmem:[#allocation3] sm:$0xff] %vm588, %v685
    %702 = vst.msk [vmem:[#allocation3 + $0x8] sm:$0xff] %vm588, %v686
    %703 = vst.msk [vmem:[#allocation3 + $0x10] sm:$0xff] %vm588, %v687
    %704 = vst.msk [vmem:[#allocation3 + $0x18] sm:$0xff] %vm588, %v688
    %705 = vst.msk [vmem:[#allocation3 + $0x20] sm:$0xff] %vm588, %v689
    %706 = vst.msk [vmem:[#allocation3 + $0x28] sm:$0xff] %vm588, %v690
    %707 = vst.msk [vmem:[#allocation3 + $0x30] sm:$0xff] %vm588, %v691
    %708 = vst.msk [vmem:[#allocation3 + $0x38] sm:$0xff] %vm588, %v692
    %709 = vst.msk [vmem:[#allocation3 + $0x40] sm:$0xff] %vm588, %v693
    %710 = vst.msk [vmem:[#allocation3 + $0x48] sm:$0xff] %vm588, %v694
    %711 = vst.msk [vmem:[#allocation3 + $0x50] sm:$0xff] %vm588, %v695
    %712 = vst.msk [vmem:[#allocation3 + $0x58] sm:$0xff] %vm588, %v696
    %713 = vst.msk [vmem:[#allocation3 + $0x60] sm:$0xff] %vm588, %v697
    %714 = vst.msk [vmem:[#allocation3 + $0x68] sm:$0xff] %vm588, %v698
    %715 = vst.msk [vmem:[#allocation3 + $0x70] sm:$0xff] %vm588, %v699
    %716 = vst.msk [vmem:[#allocation3 + $0x78] sm:$0xff] %vm588, %v700
    %v717 = vsel %vm443, %v508, 0.0
    %v718 = vsel %vm444, %v509, 0.0
    %v719 = vsel %vm445, %v510, 0.0
    %v720 = vsel %vm446, %v511, 0.0
    %v721 = vsel %vm447, %v512, 0.0
    %v722 = vsel %vm448, %v513, 0.0
    %v723 = vsel %vm449, %v514, 0.0
    %v724 = vsel %vm450, %v515, 0.0
    %v725 = vsel %vm451, %v516, 0.0
    %v726 = vsel %vm452, %v517, 0.0
    %v727 = vsel %vm453, %v518, 0.0
    %v728 = vsel %vm454, %v519, 0.0
    %v729 = vsel %vm455, %v520, 0.0
    %v730 = vsel %vm456, %v521, 0.0
    %v731 = vsel %vm457, %v522, 0.0
    %v732 = vsel %vm458, %v523, 0.0
    %v733 = vadd.f32 %v717, %v718
    %v734 = vadd.f32 %v733, %v719
    %v735 = vadd.f32 %v734, %v720
    %v736 = vadd.f32 %v735, %v721
    %v737 = vadd.f32 %v736, %v722
    %v738 = vadd.f32 %v737, %v723
    %v739 = vadd.f32 %v738, %v724
    %v740 = vadd.f32 %v739, %v725
    %v741 = vadd.f32 %v740, %v726
    %v742 = vadd.f32 %v741, %v727
    %v743 = vadd.f32 %v742, %v728
    %v744 = vadd.f32 %v743, %v729
    %v745 = vadd.f32 %v744, %v730
    %v746 = vadd.f32 %v745, %v731
    %v747 = vadd.f32 %v746, %v732
    %v748 = vrot.slane %v747, 4
    %v749 = vadd.f32 %v747, %v748
    %v750 = vrot.slane %v749, 2
    %v751 = vadd.f32 %v749, %v750
    %v752 = vrot.slane %v751, 1
    %v753 = vadd.f32 %v751, %v752
    %vm754 = vcmp.eq.s32.totalorder %v406, 0
    %v755 = vsel %vm754, %v753, 0.0
    %756 = vst [vmem:[#allocation10] sm:$0xff] %v755
    // Predicated region
    $region22: #{tpu_custom_call.1} parent=1 // pred_check
      %p757 = pneg %p47
    $region23: #{tpu_custom_call.1} parent=1 // pred_check_branch
      %759 = sbr.rel (%p757) target = $region25
    $region24: #{tpu_custom_call.1} parent=1 // pred_region
      %v760 = vld [vmem:[#allocation2] sm:$0xff]
      %v761 = vld [vmem:[#allocation2 + $0x8] sm:$0xff]
      %v762 = vld [vmem:[#allocation2 + $0x10] sm:$0xff]
      %v763 = vld [vmem:[#allocation2 + $0x18] sm:$0xff]
      %v764 = vld [vmem:[#allocation2 + $0x20] sm:$0xff]
      %v765 = vld [vmem:[#allocation2 + $0x28] sm:$0xff]
      %v766 = vld [vmem:[#allocation2 + $0x30] sm:$0xff]
      %v767 = vld [vmem:[#allocation2 + $0x38] sm:$0xff]
      %v768 = vld [vmem:[#allocation2 + $0x40] sm:$0xff]
      %v769 = vld [vmem:[#allocation2 + $0x48] sm:$0xff]
      %v770 = vld [vmem:[#allocation2 + $0x50] sm:$0xff]
      %v771 = vld [vmem:[#allocation2 + $0x58] sm:$0xff]
      %v772 = vld [vmem:[#allocation2 + $0x60] sm:$0xff]
      %v773 = vld [vmem:[#allocation2 + $0x68] sm:$0xff]
      %v774 = vld [vmem:[#allocation2 + $0x70] sm:$0xff]
      %v775 = vld [vmem:[#allocation2 + $0x78] sm:$0xff]
      %v776 = vlog2.pop %v760
      %v777 = vmul.f32 %v776, 0.6931472
      %v778 = vlog2.pop %v761
      %v779 = vmul.f32 %v778, 0.6931472
      %v780 = vlog2.pop %v762
      %v781 = vmul.f32 %v780, 0.6931472
      %v782 = vlog2.pop %v763
      %v783 = vmul.f32 %v782, 0.6931472
      %v784 = vlog2.pop %v764
      %v785 = vmul.f32 %v784, 0.6931472
      %v786 = vlog2.pop %v765
      %v787 = vmul.f32 %v786, 0.6931472
      %v788 = vlog2.pop %v766
      %v789 = vmul.f32 %v788, 0.6931472
      %v790 = vlog2.pop %v767
      %v791 = vmul.f32 %v790, 0.6931472
      %v792 = vlog2.pop %v768
      %v793 = vmul.f32 %v792, 0.6931472
      %v794 = vlog2.pop %v769
      %v795 = vmul.f32 %v794, 0.6931472
      %v796 = vlog2.pop %v770
      %v797 = vmul.f32 %v796, 0.6931472
      %v798 = vlog2.pop %v771
      %v799 = vmul.f32 %v798, 0.6931472
      %v800 = vlog2.pop %v772
      %v801 = vmul.f32 %v800, 0.6931472
      %v802 = vlog2.pop %v773
      %v803 = vmul.f32 %v802, 0.6931472
      %v804 = vlog2.pop %v774
      %v805 = vmul.f32 %v804, 0.6931472
      %v806 = vlog2.pop %v775
      %v807 = vmul.f32 %v806, 0.6931472
      %v808 = vadd.f32 %v777, 14.285714
      %v809 = vadd.f32 %v779, 14.285714
      %v810 = vadd.f32 %v781, 14.285714
      %v811 = vadd.f32 %v783, 14.285714
      %v812 = vadd.f32 %v785, 14.285714
      %v813 = vadd.f32 %v787, 14.285714
      %v814 = vadd.f32 %v789, 14.285714
      %v815 = vadd.f32 %v791, 14.285714
      %v816 = vadd.f32 %v793, 14.285714
      %v817 = vadd.f32 %v795, 14.285714
      %v818 = vadd.f32 %v797, 14.285714
      %v819 = vadd.f32 %v799, 14.285714
      %v820 = vadd.f32 %v801, 14.285714
      %v821 = vadd.f32 %v803, 14.285714
      %v822 = vadd.f32 %v805, 14.285714
      %v823 = vadd.f32 %v807, 14.285714
      %v824 = vld [vmem:[#allocation3] sm:$0xff]
      %v825 = vld [vmem:[#allocation3 + $0x8] sm:$0xff]
      %v826 = vld [vmem:[#allocation3 + $0x10] sm:$0xff]
      %v827 = vld [vmem:[#allocation3 + $0x18] sm:$0xff]
      %v828 = vld [vmem:[#allocation3 + $0x20] sm:$0xff]
      %v829 = vld [vmem:[#allocation3 + $0x28] sm:$0xff]
      %v830 = vld [vmem:[#allocation3 + $0x30] sm:$0xff]
      %v831 = vld [vmem:[#allocation3 + $0x38] sm:$0xff]
      %v832 = vld [vmem:[#allocation3 + $0x40] sm:$0xff]
      %v833 = vld [vmem:[#allocation3 + $0x48] sm:$0xff]
      %v834 = vld [vmem:[#allocation3 + $0x50] sm:$0xff]
      %v835 = vld [vmem:[#allocation3 + $0x58] sm:$0xff]
      %v836 = vld [vmem:[#allocation3 + $0x60] sm:$0xff]
      %v837 = vld [vmem:[#allocation3 + $0x68] sm:$0xff]
      %v838 = vld [vmem:[#allocation3 + $0x70] sm:$0xff]
      %v839 = vld [vmem:[#allocation3 + $0x78] sm:$0xff]
      %v840 = vsub.f32 %v808, %v824
      %v841 = vsub.f32 %v809, %v825
      %v842 = vsub.f32 %v810, %v826
      %v843 = vsub.f32 %v811, %v827
      %v844 = vsub.f32 %v812, %v828
      %v845 = vsub.f32 %v813, %v829
      %v846 = vsub.f32 %v814, %v830
      %v847 = vsub.f32 %v815, %v831
      %v848 = vsub.f32 %v816, %v832
      %v849 = vsub.f32 %v817, %v833
      %v850 = vsub.f32 %v818, %v834
      %v851 = vsub.f32 %v819, %v835
      %v852 = vsub.f32 %v820, %v836
      %v853 = vsub.f32 %v821, %v837
      %v854 = vsub.f32 %v822, %v838
      %v855 = vsub.f32 %v823, %v839
      %v856 = vsel %vm443, %v840, 0.0
      %v857 = vsel %vm444, %v841, 0.0
      %v858 = vsel %vm445, %v842, 0.0
      %v859 = vsel %vm446, %v843, 0.0
      %v860 = vsel %vm447, %v844, 0.0
      %v861 = vsel %vm448, %v845, 0.0
      %v862 = vsel %vm449, %v846, 0.0
      %v863 = vsel %vm450, %v847, 0.0
      %v864 = vsel %vm451, %v848, 0.0
      %v865 = vsel %vm452, %v849, 0.0
      %v866 = vsel %vm453, %v850, 0.0
      %v867 = vsel %vm454, %v851, 0.0
      %v868 = vsel %vm455, %v852, 0.0
      %v869 = vsel %vm456, %v853, 0.0
      %v870 = vsel %vm457, %v854, 0.0
      %v871 = vsel %vm458, %v855, 0.0
      %v872 = vsel %vm588, %v856, 0.0
      %v873 = vsel %vm588, %v857, 0.0
      %v874 = vadd.f32 %v872, %v873
      %v875 = vsel %vm588, %v858, 0.0
      %v876 = vadd.f32 %v874, %v875
      %v877 = vsel %vm588, %v859, 0.0
      %v878 = vadd.f32 %v876, %v877
      %v879 = vsel %vm588, %v860, 0.0
      %v880 = vadd.f32 %v878, %v879
      %v881 = vsel %vm588, %v861, 0.0
      %v882 = vadd.f32 %v880, %v881
      %v883 = vsel %vm588, %v862, 0.0
      %v884 = vadd.f32 %v882, %v883
      %v885 = vsel %vm588, %v863, 0.0
      %v886 = vadd.f32 %v884, %v885
      %v887 = vsel %vm588, %v864, 0.0
      %v888 = vadd.f32 %v886, %v887
      %v889 = vsel %vm588, %v865, 0.0
      %v890 = vadd.f32 %v888, %v889
      %v891 = vsel %vm588, %v866, 0.0
      %v892 = vadd.f32 %v890, %v891
      %v893 = vsel %vm588, %v867, 0.0
      %v894 = vadd.f32 %v892, %v893
      %v895 = vsel %vm588, %v868, 0.0
      %v896 = vadd.f32 %v894, %v895
      %v897 = vsel %vm588, %v869, 0.0
      %v898 = vadd.f32 %v896, %v897
      %v899 = vsel %vm588, %v870, 0.0
      %v900 = vadd.f32 %v898, %v899
      %v901 = vsel %vm588, %v871, 0.0
      %v902 = vadd.f32 %v900, %v901
      %903 = vadd.xlane.f32.xlu0 %v902
      %v904 = vpop.xlane.xlu0 %903
      %v905 = vrot.slane %v904, 4
      %v906 = vadd.f32 %v904, %v905
      %v907 = vrot.slane %v906, 2
      %v908 = vadd.f32 %v906, %v907
      %v909 = vrot.slane %v908, 1
      %v910 = vadd.f32 %v908, %v909
      %s911 = vtos %v910
      %v912 = vsel %vm443, %v824, 0.0
      %v913 = vsel %vm444, %v825, 0.0
      %v914 = vsel %vm445, %v826, 0.0
      %v915 = vsel %vm446, %v827, 0.0
      %v916 = vsel %vm447, %v828, 0.0
      %v917 = vsel %vm448, %v829, 0.0
      %v918 = vsel %vm449, %v830, 0.0
      %v919 = vsel %vm450, %v831, 0.0
      %v920 = vsel %vm451, %v832, 0.0
      %v921 = vsel %vm452, %v833, 0.0
      %v922 = vsel %vm453, %v834, 0.0
      %v923 = vsel %vm454, %v835, 0.0
      %v924 = vsel %vm455, %v836, 0.0
      %v925 = vsel %vm456, %v837, 0.0
      %v926 = vsel %vm457, %v838, 0.0
      %v927 = vsel %vm458, %v839, 0.0
      %v928 = vsel %vm588, %v912, 0.0
      %v929 = vsel %vm588, %v913, 0.0
      %v930 = vadd.f32 %v928, %v929
      %v931 = vsel %vm588, %v914, 0.0
      %v932 = vadd.f32 %v930, %v931
      %v933 = vsel %vm588, %v915, 0.0
      %v934 = vadd.f32 %v932, %v933
      %v935 = vsel %vm588, %v916, 0.0
      %v936 = vadd.f32 %v934, %v935
      %v937 = vsel %vm588, %v917, 0.0
      %v938 = vadd.f32 %v936, %v937
      %v939 = vsel %vm588, %v918, 0.0
      %v940 = vadd.f32 %v938, %v939
      %v941 = vsel %vm588, %v919, 0.0
      %v942 = vadd.f32 %v940, %v941
      %v943 = vsel %vm588, %v920, 0.0
      %v944 = vadd.f32 %v942, %v943
      %v945 = vsel %vm588, %v921, 0.0
      %v946 = vadd.f32 %v944, %v945
      %v947 = vsel %vm588, %v922, 0.0
      %v948 = vadd.f32 %v946, %v947
      %v949 = vsel %vm588, %v923, 0.0
      %v950 = vadd.f32 %v948, %v949
      %v951 = vsel %vm588, %v924, 0.0
      %v952 = vadd.f32 %v950, %v951
      %v953 = vsel %vm588, %v925, 0.0
      %v954 = vadd.f32 %v952, %v953
      %v955 = vsel %vm588, %v926, 0.0
      %v956 = vadd.f32 %v954, %v955
      %v957 = vsel %vm588, %v927, 0.0
      %v958 = vadd.f32 %v956, %v957
      %959 = vadd.xlane.f32.xlu0 %v958
      %v960 = vpop.xlane.xlu0 %959
      %v961 = vrot.slane %v960, 4
      %v962 = vadd.f32 %v960, %v961
      %v963 = vrot.slane %v962, 2
      %v964 = vadd.f32 %v962, %v963
      %v965 = vrot.slane %v964, 1
      %v966 = vadd.f32 %v964, %v965
      %s967 = vtos %v966
      %vm968 = vcmp.eq.s32.totalorder %v440, 0
      %vm969 = vmand %vm754, %vm968
      %v970 = vstv %s911
      %v971 = vsel %vm969, %v970, 0.0
      %vm972 = vcmp.eq.s32.totalorder %v440, 1
      %vm973 = vmand %vm754, %vm972
      %v974 = vstv %s967
      %v975 = vsel %vm973, %v974, 0.0
      %v976 = vadd.f32 %v971, %v975
      %977 = vst [vmem:[#allocation12] sm:$0xff] %v976
    $region25: #{tpu_custom_call.1} parent=1 // pred_fallthru
      _
    // Predicated region
    $region26: #{tpu_custom_call.1} parent=1 // pred_check
      _
    $region27: #{tpu_custom_call.1} parent=1 // pred_check_branch
      %979 = sbr.rel (0) target = $region29
    $region28: #{tpu_custom_call.1} parent=1 // pred_region
      %s981 = ssub.s32 1024, 1024
      %982 = vsyncadd [#allocation6], %s981
      %s983 = sshll.u32 [#allocation9], 4
      %s984 = int_to_ptr.vmem [resolvable:$true] %s983
      %989 = dma.vmem_to_hbm [thread:$0]  %s984, 1024, %s2, [#allocation6], 64, 64, 4
    $region29: #{tpu_custom_call.1} parent=1 // pred_fallthru
      _
    // Predicated region
    $region30: #{tpu_custom_call.1} parent=1 // pred_check
      _
    $region31: #{tpu_custom_call.1} parent=1 // pred_check_branch
      %991 = sbr.rel (0) target = $region33
    $region32: #{tpu_custom_call.1} parent=1 // pred_region
      %s993 = ssub.s32 128, 128
      %994 = vsyncadd [#allocation11], %s993
      %s996 = sshll.u32 [#allocation10], 4
      %s997 = int_to_ptr.vmem [resolvable:$true] %s996
      %999 = dma.vmem_to_hbm [thread:$0]  %s997, 128, %s3, [#allocation11]
    $region33: #{tpu_custom_call.1} parent=1 // pred_fallthru
      _
    // Predicated region
    $region34: #{tpu_custom_call.1} parent=1 // pred_check
      _
    $region35: #{tpu_custom_call.1} parent=1 // pred_check_branch
      %1001 = sbr.rel (0) target = $region37
    $region36: #{tpu_custom_call.1} parent=1 // pred_region
      %s1003 = ssub.s32 128, 128
      %1004 = vsyncadd [#allocation11], %s1003
      %s1006 = sshll.u32 [#allocation12], 4
      %s1007 = int_to_ptr.vmem [resolvable:$true] %s1006
      %1009 = dma.vmem_to_hbm [thread:$0]  %s1007, 128, %s4, [#allocation11]
    $region37: #{tpu_custom_call.1} parent=1 // pred_fallthru
      _
    // Predicated region
    $region38: #{tpu_custom_call.1} parent=1 // pred_check
      _
    $region39: #{tpu_custom_call.1} parent=1 // pred_check_branch
      %1011 = sbr.rel (0) target = $region41
    $region40: #{tpu_custom_call.1} parent=1 // pred_region
      %1012 = dma.done [#allocation6], 1024
    $region41: #{tpu_custom_call.1} parent=1 // pred_fallthru
      _
    // Predicated region
    $region42: #{tpu_custom_call.1} parent=1 // pred_check
      _
    $region43: #{tpu_custom_call.1} parent=1 // pred_check_branch
      %1014 = sbr.rel (0) target = $region45
    $region44: #{tpu_custom_call.1} parent=1 // pred_region
      %1015 = dma.done [#allocation11], 128
    $region45: #{tpu_custom_call.1} parent=1 // pred_fallthru
      _
    // Predicated region
    $region46: #{tpu_custom_call.1} parent=1 // pred_check
      _
    $region47: #{tpu_custom_call.1} parent=1 // pred_check_branch
      %1017 = sbr.rel (0) target = $region49
    $region48: #{tpu_custom_call.1} parent=1 // pred_region
      %1018 = dma.done [#allocation11], 128
    $region49: #{tpu_custom_call.1} parent=1 // pred_fallthru
      _
    %1019 = vsyncpa [#allocation5], 1
    %1020 = vsyncpa [#allocation8], 1
    %1021 = vsyncpa [#allocation6], 1
    %1022 = vsyncpa [#allocation11], 1

</llo_original>
